<compile_context>
chip_gen: v7x
topology: tpu7x:2x2x1
jax: 0.10.0
libtpu: 0.0.40
codegen_flags: <defaults>
</compile_context>

<pallas_src>
import functools

import jax
import jax.numpy as jnp
from jax.experimental import pallas as pl
from jax.experimental.pallas import tpu as pltpu


def _srgb_kernel(wproj_ref, bias_ref, x_ref, out_ref, w_ref, *,
                 wbset_num, inchnls):
    # wproj_ref: (Cin, K)  SMEM  — 1x1 conv / token-projection weights
    # bias_ref:  (B, K)    SMEM  — per-batch bias (hist/PDF head + b_proj)
    # x_ref:     (1, Cin, T)     — pixel tile, HW on the lane axis
    # out_ref:   (1, 3, T)       — blended sRGB output tile
    # w_ref:     (1, K, T)       — softmax blending weights tile
    b = pl.program_id(0)
    x = x_ref[0]                                   # (Cin, T) f32, lane-dense

    # logits[k] = sum_c wproj[c, k] * x[c, :] + bias[b, k]
    # (unrolled VPU scalar-broadcast FMAs; K*Cin = 27 mul/adds per tile)
    logits = []
    for k in range(wbset_num):
        acc = x[0:1, :] * wproj_ref[0, k]
        for c in range(1, inchnls):
            acc = acc + x[c:c + 1, :] * wproj_ref[c, k]
        acc = acc + bias_ref[b, k]
        # torch.clamp(weights, -1000, 1000)
        logits.append(jnp.clip(acc, -1000.0, 1000.0))

    # nn.Softmax(dim=1): softmax across the K logit rows, per pixel.
    m = logits[0]
    for k in range(1, wbset_num):
        m = jnp.maximum(m, logits[k])
    e = [jnp.exp(l - m) for l in logits]
    s = e[0]
    for k in range(1, wbset_num):
        s = s + e[k]
    inv = pl.reciprocal(s, approx=True)            # EUP, effectively free
    w = [ek * inv for ek in e]

    # out_img[j] = sum_k weights[k] * x[3k + j]
    outs = []
    for j in range(3):
        o = w[0] * x[j:j + 1, :]
        for k in range(1, wbset_num):
            o = o + w[k] * x[3 * k + j:3 * k + j + 1, :]
        outs.append(o)

    out_ref[0] = jnp.concatenate(outs, axis=0)     # (3, T), lane-dense store
    w_ref[0] = jnp.concatenate(w, axis=0)          # (K, T), lane-dense store


def srgbnet_forward(x_nchw, hist_W, PDFLab_W, params, *, wbset_num=3,
                    max_tile=16384):
    """x_nchw: (B, inchnls, H, W) float32. Returns (out_img NCHW, weights NCHW)."""
    B, Cin, H, W = x_nchw.shape
    K = wbset_num
    assert Cin == 3 * K, "inchnls must equal 3 * wbset_num"
    HW = H * W

    # channel-minor: (B, Cin, HW) — this is just a reshape of NCHW, no transpose.
    x_flat = x_nchw.reshape(B, Cin, HW).astype(jnp.float32)

    # lane-axis tile: multiple of 128, capped for VMEM headroom on all gens
    # (per step: x (16,T) + out (8,T) + w (8,T) f32, double-buffered ≈ 32*T*4*2 B
    #  → ~4 MiB at T=16384, far under v7x's 32 MiB scoped default).
    T = min(max_tile, pl.cdiv(HW, 128) * 128)
    hw_pad = pl.cdiv(HW, T) * T
    if hw_pad != HW:
        x_flat = jnp.pad(x_flat, ((0, 0), (0, 0), (0, hw_pad - HW)))

    # per-batch logit bias from the auxiliary histogram inputs, b_proj folded in
    hist_flat = hist_W.reshape(B, -1).astype(jnp.float32)
    pdf_flat = PDFLab_W.reshape(B, -1).astype(jnp.float32)
    bias = (hist_flat @ params["w_hist"] + pdf_flat @ params["w_pdf"]
            + params["b_proj"][None, :]).astype(jnp.float32)        # (B, K)

    wproj = params["w_proj"].astype(jnp.float32)                    # (Cin, K)

    kernel = functools.partial(_srgb_kernel, wbset_num=K, inchnls=Cin)

    out_p, w_p = pl.pallas_call(
        kernel,
        out_shape=(
            jax.ShapeDtypeStruct((B, 3, hw_pad), jnp.float32),
            jax.ShapeDtypeStruct((B, K, hw_pad), jnp.float32),
        ),
        grid_spec=pltpu.PrefetchScalarGridSpec(
            num_scalar_prefetch=0,
            grid=(B, hw_pad // T),
            in_specs=[
                pl.BlockSpec(memory_space=pltpu.MemorySpace.SMEM),     # wproj
                pl.BlockSpec(memory_space=pltpu.MemorySpace.SMEM),     # bias
                pl.BlockSpec((1, Cin, T), lambda b, t: (b, 0, t)),     # x tile
            ],
            out_specs=[
                pl.BlockSpec((1, 3, T), lambda b, t: (b, 0, t)),       # out_img
                pl.BlockSpec((1, K, T), lambda b, t: (b, 0, t)),       # weights
            ],
        ),
        compiler_params=pltpu.CompilerParams(
            dimension_semantics=("parallel", "parallel")),
    )(wproj, bias, x_flat)

    out_img = out_p[:, :, :HW].reshape(B, 3, H, W)
    weights = w_p[:, :, :HW].reshape(B, K, H, W)
    return out_img, weights


def init_params(key, *, inchnls=9, wbset_num=3, hist_feat=3 * 8 * 8,
                pdf_feat=3 * 8 * 8):
    k1, k2, k3, k4 = jax.random.split(key, 4)
    return {
        "w_proj": 0.1 * jax.random.normal(k1, (inchnls, wbset_num), jnp.float32),
        "b_proj": 0.05 * jax.random.normal(k2, (wbset_num,), jnp.float32),
        "w_hist": 0.01 * jax.random.normal(k3, (hist_feat, wbset_num), jnp.float32),
        "w_pdf": 0.01 * jax.random.normal(k4, (pdf_feat, wbset_num), jnp.float32),
    }


def _reference(x, hist_W, PDFLab_W, params, wbset_num):
    """Pure-JAX reference of the same stand-in head + clamp/softmax/blend."""
    B = x.shape[0]
    hist_flat = hist_W.reshape(B, -1).astype(jnp.float32)
    pdf_flat = PDFLab_W.reshape(B, -1).astype(jnp.float32)
    bias = (hist_flat @ params["w_hist"] + pdf_flat @ params["w_pdf"]
            + params["b_proj"][None, :])
    logits = (jnp.einsum("bchw,ck->bkhw", x, params["w_proj"])
              + bias[:, :, None, None])
    logits = jnp.clip(logits, -1000.0, 1000.0)
    w = jax.nn.softmax(logits, axis=1)
    out = jnp.zeros((B, 3) + x.shape[2:], jnp.float32)
    for i in range(wbset_num):
        out = out + w[:, i:i + 1] * x[:, 3 * i:3 * i + 3]
    return out, w


if __name__ == "__main__":
    key = jax.random.PRNGKey(0)
    kp, kx, kh, kl = jax.random.split(key, 4)

    B, inchnls, H, W = 2, 9, 16, 16        # inchnls = 3 * wbset_num
    wbset_num = 3

    params = init_params(kp, inchnls=inchnls, wbset_num=wbset_num)

    x = jax.random.uniform(kx, (B, inchnls, H, W), jnp.float32)          # NCHW
    hist_W = jax.random.uniform(kh, (B, 3, 8, 8), jnp.float32)
    PDFLab_W = jax.random.uniform(kl, (B, 3, 8, 8), jnp.float32)

    out_img, weights = srgbnet_forward(x, hist_W, PDFLab_W, params,
                                       wbset_num=wbset_num)
    jax.block_until_ready((out_img, weights))

    assert out_img.shape == (B, 3, H, W)
    assert weights.shape == (B, wbset_num, H, W)

    # softmax weights sum to 1 per pixel (approx reciprocal -> looser tol)
    assert jnp.allclose(jnp.sum(weights, axis=1), 1.0, atol=5e-3)

    # match the pure-JAX reference of the same computation
    ref_out, ref_w = _reference(x, hist_W, PDFLab_W, params, wbset_num)
    assert float(jnp.max(jnp.abs(out_img - ref_out))) < 1e-2
    assert float(jnp.max(jnp.abs(weights - ref_w))) < 1e-2

    print("KERNEL_OK")
</pallas_src>

<mosaic_0001>
module attributes {stable_mosaic.version = 11 : i64} {
  func.func @_srgb_kernel(%arg0: i32, %arg1: i32, %arg2: memref<9x3xf32, #tpu.memory_space<smem>>, %arg3: memref<2x3xf32, #tpu.memory_space<smem>>, %arg4: memref<1x9x256xf32, #tpu.memory_space<vmem>>, %arg5: memref<1x3x256xf32, #tpu.memory_space<vmem>>, %arg6: memref<1x3x256xf32, #tpu.memory_space<vmem>>) attributes {dimension_semantics = [#tpu.dimension_semantics<parallel>, #tpu.dimension_semantics<parallel>], iteration_bounds = array<i64: 2, 1>, scalar_prefetch = 0 : i64, scratch_operands = 0 : i64, tpu.core_type = #tpu.core_type<tc>, window_params = [{transform_indices = @transform_0, window_bounds = array<i64: 9, 3>}, {transform_indices = @transform_1, window_bounds = array<i64: 2, 3>}, {transform_indices = @transform_2, window_bounds = array<i64: 1, 9, 256>}, {transform_indices = @transform_3, window_bounds = array<i64: 1, 3, 256>}, {transform_indices = @transform_4, window_bounds = array<i64: 1, 3, 256>}]} {
    %c0 = arith.constant 0 : index
    %c0_0 = arith.constant 0 : index
    %c0_1 = arith.constant 0 : index
    %0 = vector.load %arg4[%c0, %c0_0, %c0_1] : memref<1x9x256xf32, #tpu.memory_space<vmem>>, vector<1x9x256xf32>
    %1 = vector.shape_cast %0 : vector<1x9x256xf32> to vector<9x256xf32>
    %2 = vector.extract_strided_slice %1 {offsets = [0, 0], sizes = [1, 256], strides = [1, 1]} : vector<9x256xf32> to vector<1x256xf32>
    %c0_2 = arith.constant 0 : index
    %c0_3 = arith.constant 0 : index
    %3 = memref.load %arg2[%c0_2, %c0_3] : memref<9x3xf32, #tpu.memory_space<smem>>
    %4 = vector.broadcast %3 : f32 to vector<1x256xf32>
    %5 = arith.mulf %2, %4 : vector<1x256xf32>
    %6 = vector.extract_strided_slice %1 {offsets = [1, 0], sizes = [1, 256], strides = [1, 1]} : vector<9x256xf32> to vector<1x256xf32>
    %c1 = arith.constant 1 : index
    %c0_4 = arith.constant 0 : index
    %7 = memref.load %arg2[%c1, %c0_4] : memref<9x3xf32, #tpu.memory_space<smem>>
    %8 = vector.broadcast %7 : f32 to vector<1x256xf32>
    %9 = arith.mulf %6, %8 : vector<1x256xf32>
    %10 = arith.addf %5, %9 : vector<1x256xf32>
    %11 = vector.extract_strided_slice %1 {offsets = [2, 0], sizes = [1, 256], strides = [1, 1]} : vector<9x256xf32> to vector<1x256xf32>
    %c2 = arith.constant 2 : index
    %c0_5 = arith.constant 0 : index
    %12 = memref.load %arg2[%c2, %c0_5] : memref<9x3xf32, #tpu.memory_space<smem>>
    %13 = vector.broadcast %12 : f32 to vector<1x256xf32>
    %14 = arith.mulf %11, %13 : vector<1x256xf32>
    %15 = arith.addf %10, %14 : vector<1x256xf32>
    %16 = vector.extract_strided_slice %1 {offsets = [3, 0], sizes = [1, 256], strides = [1, 1]} : vector<9x256xf32> to vector<1x256xf32>
    %c3 = arith.constant 3 : index
    %c0_6 = arith.constant 0 : index
    %17 = memref.load %arg2[%c3, %c0_6] : memref<9x3xf32, #tpu.memory_space<smem>>
    %18 = vector.broadcast %17 : f32 to vector<1x256xf32>
    %19 = arith.mulf %16, %18 : vector<1x256xf32>
    %20 = arith.addf %15, %19 : vector<1x256xf32>
    %21 = vector.extract_strided_slice %1 {offsets = [4, 0], sizes = [1, 256], strides = [1, 1]} : vector<9x256xf32> to vector<1x256xf32>
    %c4 = arith.constant 4 : index
    %c0_7 = arith.constant 0 : index
    %22 = memref.load %arg2[%c4, %c0_7] : memref<9x3xf32, #tpu.memory_space<smem>>
    %23 = vector.broadcast %22 : f32 to vector<1x256xf32>
    %24 = arith.mulf %21, %23 : vector<1x256xf32>
    %25 = arith.addf %20, %24 : vector<1x256xf32>
    %26 = vector.extract_strided_slice %1 {offsets = [5, 0], sizes = [1, 256], strides = [1, 1]} : vector<9x256xf32> to vector<1x256xf32>
    %c5 = arith.constant 5 : index
    %c0_8 = arith.constant 0 : index
    %27 = memref.load %arg2[%c5, %c0_8] : memref<9x3xf32, #tpu.memory_space<smem>>
    %28 = vector.broadcast %27 : f32 to vector<1x256xf32>
    %29 = arith.mulf %26, %28 : vector<1x256xf32>
    %30 = arith.addf %25, %29 : vector<1x256xf32>
    %31 = vector.extract_strided_slice %1 {offsets = [6, 0], sizes = [1, 256], strides = [1, 1]} : vector<9x256xf32> to vector<1x256xf32>
    %c6 = arith.constant 6 : index
    %c0_9 = arith.constant 0 : index
    %32 = memref.load %arg2[%c6, %c0_9] : memref<9x3xf32, #tpu.memory_space<smem>>
    %33 = vector.broadcast %32 : f32 to vector<1x256xf32>
    %34 = arith.mulf %31, %33 : vector<1x256xf32>
    %35 = arith.addf %30, %34 : vector<1x256xf32>
    %36 = vector.extract_strided_slice %1 {offsets = [7, 0], sizes = [1, 256], strides = [1, 1]} : vector<9x256xf32> to vector<1x256xf32>
    %c7 = arith.constant 7 : index
    %c0_10 = arith.constant 0 : index
    %37 = memref.load %arg2[%c7, %c0_10] : memref<9x3xf32, #tpu.memory_space<smem>>
    %38 = vector.broadcast %37 : f32 to vector<1x256xf32>
    %39 = arith.mulf %36, %38 : vector<1x256xf32>
    %40 = arith.addf %35, %39 : vector<1x256xf32>
    %41 = vector.extract_strided_slice %1 {offsets = [8, 0], sizes = [1, 256], strides = [1, 1]} : vector<9x256xf32> to vector<1x256xf32>
    %c8 = arith.constant 8 : index
    %c0_11 = arith.constant 0 : index
    %42 = memref.load %arg2[%c8, %c0_11] : memref<9x3xf32, #tpu.memory_space<smem>>
    %43 = vector.broadcast %42 : f32 to vector<1x256xf32>
    %44 = arith.mulf %41, %43 : vector<1x256xf32>
    %45 = arith.addf %40, %44 : vector<1x256xf32>
    %46 = arith.index_cast %arg0 : i32 to index
    %c0_12 = arith.constant 0 : index
    %47 = memref.load %arg3[%46, %c0_12] : memref<2x3xf32, #tpu.memory_space<smem>>
    %48 = vector.broadcast %47 : f32 to vector<1x256xf32>
    %49 = arith.addf %45, %48 : vector<1x256xf32>
    %cst = arith.constant -1.000000e+03 : f32
    %cst_13 = arith.constant 1.000000e+03 : f32
    %50 = vector.broadcast %cst : f32 to vector<1x256xf32>
    %51 = arith.maximumf %50, %49 : vector<1x256xf32>
    %52 = vector.broadcast %cst_13 : f32 to vector<1x256xf32>
    %53 = arith.minimumf %52, %51 : vector<1x256xf32>
    %54 = vector.extract_strided_slice %1 {offsets = [0, 0], sizes = [1, 256], strides = [1, 1]} : vector<9x256xf32> to vector<1x256xf32>
    %c0_14 = arith.constant 0 : index
    %c1_15 = arith.constant 1 : index
    %55 = memref.load %arg2[%c0_14, %c1_15] : memref<9x3xf32, #tpu.memory_space<smem>>
    %56 = vector.broadcast %55 : f32 to vector<1x256xf32>
    %57 = arith.mulf %54, %56 : vector<1x256xf32>
    %58 = vector.extract_strided_slice %1 {offsets = [1, 0], sizes = [1, 256], strides = [1, 1]} : vector<9x256xf32> to vector<1x256xf32>
    %c1_16 = arith.constant 1 : index
    %c1_17 = arith.constant 1 : index
    %59 = memref.load %arg2[%c1_16, %c1_17] : memref<9x3xf32, #tpu.memory_space<smem>>
    %60 = vector.broadcast %59 : f32 to vector<1x256xf32>
    %61 = arith.mulf %58, %60 : vector<1x256xf32>
    %62 = arith.addf %57, %61 : vector<1x256xf32>
    %63 = vector.extract_strided_slice %1 {offsets = [2, 0], sizes = [1, 256], strides = [1, 1]} : vector<9x256xf32> to vector<1x256xf32>
    %c2_18 = arith.constant 2 : index
    %c1_19 = arith.constant 1 : index
    %64 = memref.load %arg2[%c2_18, %c1_19] : memref<9x3xf32, #tpu.memory_space<smem>>
    %65 = vector.broadcast %64 : f32 to vector<1x256xf32>
    %66 = arith.mulf %63, %65 : vector<1x256xf32>
    %67 = arith.addf %62, %66 : vector<1x256xf32>
    %68 = vector.extract_strided_slice %1 {offsets = [3, 0], sizes = [1, 256], strides = [1, 1]} : vector<9x256xf32> to vector<1x256xf32>
    %c3_20 = arith.constant 3 : index
    %c1_21 = arith.constant 1 : index
    %69 = memref.load %arg2[%c3_20, %c1_21] : memref<9x3xf32, #tpu.memory_space<smem>>
    %70 = vector.broadcast %69 : f32 to vector<1x256xf32>
    %71 = arith.mulf %68, %70 : vector<1x256xf32>
    %72 = arith.addf %67, %71 : vector<1x256xf32>
    %73 = vector.extract_strided_slice %1 {offsets = [4, 0], sizes = [1, 256], strides = [1, 1]} : vector<9x256xf32> to vector<1x256xf32>
    %c4_22 = arith.constant 4 : index
    %c1_23 = arith.constant 1 : index
    %74 = memref.load %arg2[%c4_22, %c1_23] : memref<9x3xf32, #tpu.memory_space<smem>>
    %75 = vector.broadcast %74 : f32 to vector<1x256xf32>
    %76 = arith.mulf %73, %75 : vector<1x256xf32>
    %77 = arith.addf %72, %76 : vector<1x256xf32>
    %78 = vector.extract_strided_slice %1 {offsets = [5, 0], sizes = [1, 256], strides = [1, 1]} : vector<9x256xf32> to vector<1x256xf32>
    %c5_24 = arith.constant 5 : index
    %c1_25 = arith.constant 1 : index
    %79 = memref.load %arg2[%c5_24, %c1_25] : memref<9x3xf32, #tpu.memory_space<smem>>
    %80 = vector.broadcast %79 : f32 to vector<1x256xf32>
    %81 = arith.mulf %78, %80 : vector<1x256xf32>
    %82 = arith.addf %77, %81 : vector<1x256xf32>
    %83 = vector.extract_strided_slice %1 {offsets = [6, 0], sizes = [1, 256], strides = [1, 1]} : vector<9x256xf32> to vector<1x256xf32>
    %c6_26 = arith.constant 6 : index
    %c1_27 = arith.constant 1 : index
    %84 = memref.load %arg2[%c6_26, %c1_27] : memref<9x3xf32, #tpu.memory_space<smem>>
    %85 = vector.broadcast %84 : f32 to vector<1x256xf32>
    %86 = arith.mulf %83, %85 : vector<1x256xf32>
    %87 = arith.addf %82, %86 : vector<1x256xf32>
    %88 = vector.extract_strided_slice %1 {offsets = [7, 0], sizes = [1, 256], strides = [1, 1]} : vector<9x256xf32> to vector<1x256xf32>
    %c7_28 = arith.constant 7 : index
    %c1_29 = arith.constant 1 : index
    %89 = memref.load %arg2[%c7_28, %c1_29] : memref<9x3xf32, #tpu.memory_space<smem>>
    %90 = vector.broadcast %89 : f32 to vector<1x256xf32>
    %91 = arith.mulf %88, %90 : vector<1x256xf32>
    %92 = arith.addf %87, %91 : vector<1x256xf32>
    %93 = vector.extract_strided_slice %1 {offsets = [8, 0], sizes = [1, 256], strides = [1, 1]} : vector<9x256xf32> to vector<1x256xf32>
    %c8_30 = arith.constant 8 : index
    %c1_31 = arith.constant 1 : index
    %94 = memref.load %arg2[%c8_30, %c1_31] : memref<9x3xf32, #tpu.memory_space<smem>>
    %95 = vector.broadcast %94 : f32 to vector<1x256xf32>
    %96 = arith.mulf %93, %95 : vector<1x256xf32>
    %97 = arith.addf %92, %96 : vector<1x256xf32>
    %98 = arith.index_cast %arg0 : i32 to index
    %c1_32 = arith.constant 1 : index
    %99 = memref.load %arg3[%98, %c1_32] : memref<2x3xf32, #tpu.memory_space<smem>>
    %100 = vector.broadcast %99 : f32 to vector<1x256xf32>
    %101 = arith.addf %97, %100 : vector<1x256xf32>
    %cst_33 = arith.constant -1.000000e+03 : f32
    %cst_34 = arith.constant 1.000000e+03 : f32
    %102 = vector.broadcast %cst_33 : f32 to vector<1x256xf32>
    %103 = arith.maximumf %102, %101 : vector<1x256xf32>
    %104 = vector.broadcast %cst_34 : f32 to vector<1x256xf32>
    %105 = arith.minimumf %104, %103 : vector<1x256xf32>
    %106 = vector.extract_strided_slice %1 {offsets = [0, 0], sizes = [1, 256], strides = [1, 1]} : vector<9x256xf32> to vector<1x256xf32>
    %c0_35 = arith.constant 0 : index
    %c2_36 = arith.constant 2 : index
    %107 = memref.load %arg2[%c0_35, %c2_36] : memref<9x3xf32, #tpu.memory_space<smem>>
    %108 = vector.broadcast %107 : f32 to vector<1x256xf32>
    %109 = arith.mulf %106, %108 : vector<1x256xf32>
    %110 = vector.extract_strided_slice %1 {offsets = [1, 0], sizes = [1, 256], strides = [1, 1]} : vector<9x256xf32> to vector<1x256xf32>
    %c1_37 = arith.constant 1 : index
    %c2_38 = arith.constant 2 : index
    %111 = memref.load %arg2[%c1_37, %c2_38] : memref<9x3xf32, #tpu.memory_space<smem>>
    %112 = vector.broadcast %111 : f32 to vector<1x256xf32>
    %113 = arith.mulf %110, %112 : vector<1x256xf32>
    %114 = arith.addf %109, %113 : vector<1x256xf32>
    %115 = vector.extract_strided_slice %1 {offsets = [2, 0], sizes = [1, 256], strides = [1, 1]} : vector<9x256xf32> to vector<1x256xf32>
    %c2_39 = arith.constant 2 : index
    %c2_40 = arith.constant 2 : index
    %116 = memref.load %arg2[%c2_39, %c2_40] : memref<9x3xf32, #tpu.memory_space<smem>>
    %117 = vector.broadcast %116 : f32 to vector<1x256xf32>
    %118 = arith.mulf %115, %117 : vector<1x256xf32>
    %119 = arith.addf %114, %118 : vector<1x256xf32>
    %120 = vector.extract_strided_slice %1 {offsets = [3, 0], sizes = [1, 256], strides = [1, 1]} : vector<9x256xf32> to vector<1x256xf32>
    %c3_41 = arith.constant 3 : index
    %c2_42 = arith.constant 2 : index
    %121 = memref.load %arg2[%c3_41, %c2_42] : memref<9x3xf32, #tpu.memory_space<smem>>
    %122 = vector.broadcast %121 : f32 to vector<1x256xf32>
    %123 = arith.mulf %120, %122 : vector<1x256xf32>
    %124 = arith.addf %119, %123 : vector<1x256xf32>
    %125 = vector.extract_strided_slice %1 {offsets = [4, 0], sizes = [1, 256], strides = [1, 1]} : vector<9x256xf32> to vector<1x256xf32>
    %c4_43 = arith.constant 4 : index
    %c2_44 = arith.constant 2 : index
    %126 = memref.load %arg2[%c4_43, %c2_44] : memref<9x3xf32, #tpu.memory_space<smem>>
    %127 = vector.broadcast %126 : f32 to vector<1x256xf32>
    %128 = arith.mulf %125, %127 : vector<1x256xf32>
    %129 = arith.addf %124, %128 : vector<1x256xf32>
    %130 = vector.extract_strided_slice %1 {offsets = [5, 0], sizes = [1, 256], strides = [1, 1]} : vector<9x256xf32> to vector<1x256xf32>
    %c5_45 = arith.constant 5 : index
    %c2_46 = arith.constant 2 : index
    %131 = memref.load %arg2[%c5_45, %c2_46] : memref<9x3xf32, #tpu.memory_space<smem>>
    %132 = vector.broadcast %131 : f32 to vector<1x256xf32>
    %133 = arith.mulf %130, %132 : vector<1x256xf32>
    %134 = arith.addf %129, %133 : vector<1x256xf32>
    %135 = vector.extract_strided_slice %1 {offsets = [6, 0], sizes = [1, 256], strides = [1, 1]} : vector<9x256xf32> to vector<1x256xf32>
    %c6_47 = arith.constant 6 : index
    %c2_48 = arith.constant 2 : index
    %136 = memref.load %arg2[%c6_47, %c2_48] : memref<9x3xf32, #tpu.memory_space<smem>>
    %137 = vector.broadcast %136 : f32 to vector<1x256xf32>
    %138 = arith.mulf %135, %137 : vector<1x256xf32>
    %139 = arith.addf %134, %138 : vector<1x256xf32>
    %140 = vector.extract_strided_slice %1 {offsets = [7, 0], sizes = [1, 256], strides = [1, 1]} : vector<9x256xf32> to vector<1x256xf32>
    %c7_49 = arith.constant 7 : index
    %c2_50 = arith.constant 2 : index
    %141 = memref.load %arg2[%c7_49, %c2_50] : memref<9x3xf32, #tpu.memory_space<smem>>
    %142 = vector.broadcast %141 : f32 to vector<1x256xf32>
    %143 = arith.mulf %140, %142 : vector<1x256xf32>
    %144 = arith.addf %139, %143 : vector<1x256xf32>
    %145 = vector.extract_strided_slice %1 {offsets = [8, 0], sizes = [1, 256], strides = [1, 1]} : vector<9x256xf32> to vector<1x256xf32>
    %c8_51 = arith.constant 8 : index
    %c2_52 = arith.constant 2 : index
    %146 = memref.load %arg2[%c8_51, %c2_52] : memref<9x3xf32, #tpu.memory_space<smem>>
    %147 = vector.broadcast %146 : f32 to vector<1x256xf32>
    %148 = arith.mulf %145, %147 : vector<1x256xf32>
    %149 = arith.addf %144, %148 : vector<1x256xf32>
    %150 = arith.index_cast %arg0 : i32 to index
    %c2_53 = arith.constant 2 : index
    %151 = memref.load %arg3[%150, %c2_53] : memref<2x3xf32, #tpu.memory_space<smem>>
    %152 = vector.broadcast %151 : f32 to vector<1x256xf32>
    %153 = arith.addf %149, %152 : vector<1x256xf32>
    %cst_54 = arith.constant -1.000000e+03 : f32
    %cst_55 = arith.constant 1.000000e+03 : f32
    %154 = vector.broadcast %cst_54 : f32 to vector<1x256xf32>
    %155 = arith.maximumf %154, %153 : vector<1x256xf32>
    %156 = vector.broadcast %cst_55 : f32 to vector<1x256xf32>
    %157 = arith.minimumf %156, %155 : vector<1x256xf32>
    %158 = arith.maximumf %53, %105 : vector<1x256xf32>
    %159 = arith.maximumf %158, %157 : vector<1x256xf32>
    %160 = arith.subf %53, %159 : vector<1x256xf32>
    %161 = math.exp %160 : vector<1x256xf32>
    %162 = arith.subf %105, %159 : vector<1x256xf32>
    %163 = math.exp %162 : vector<1x256xf32>
    %164 = arith.subf %157, %159 : vector<1x256xf32>
    %165 = math.exp %164 : vector<1x256xf32>
    %166 = arith.addf %161, %163 : vector<1x256xf32>
    %167 = arith.addf %166, %165 : vector<1x256xf32>
    %168 = tpu.reciprocal %167 {approx = true} : vector<1x256xf32> -> vector<1x256xf32>
    %169 = arith.mulf %161, %168 : vector<1x256xf32>
    %170 = arith.mulf %163, %168 : vector<1x256xf32>
    %171 = arith.mulf %165, %168 : vector<1x256xf32>
    %172 = vector.extract_strided_slice %1 {offsets = [0, 0], sizes = [1, 256], strides = [1, 1]} : vector<9x256xf32> to vector<1x256xf32>
    %173 = arith.mulf %169, %172 : vector<1x256xf32>
    %174 = vector.extract_strided_slice %1 {offsets = [3, 0], sizes = [1, 256], strides = [1, 1]} : vector<9x256xf32> to vector<1x256xf32>
    %175 = arith.mulf %170, %174 : vector<1x256xf32>
    %176 = arith.addf %173, %175 : vector<1x256xf32>
    %177 = vector.extract_strided_slice %1 {offsets = [6, 0], sizes = [1, 256], strides = [1, 1]} : vector<9x256xf32> to vector<1x256xf32>
    %178 = arith.mulf %171, %177 : vector<1x256xf32>
    %179 = arith.addf %176, %178 : vector<1x256xf32>
    %180 = vector.extract_strided_slice %1 {offsets = [1, 0], sizes = [1, 256], strides = [1, 1]} : vector<9x256xf32> to vector<1x256xf32>
    %181 = arith.mulf %169, %180 : vector<1x256xf32>
    %182 = vector.extract_strided_slice %1 {offsets = [4, 0], sizes = [1, 256], strides = [1, 1]} : vector<9x256xf32> to vector<1x256xf32>
    %183 = arith.mulf %170, %182 : vector<1x256xf32>
    %184 = arith.addf %181, %183 : vector<1x256xf32>
    %185 = vector.extract_strided_slice %1 {offsets = [7, 0], sizes = [1, 256], strides = [1, 1]} : vector<9x256xf32> to vector<1x256xf32>
    %186 = arith.mulf %171, %185 : vector<1x256xf32>
    %187 = arith.addf %184, %186 : vector<1x256xf32>
    %188 = vector.extract_strided_slice %1 {offsets = [2, 0], sizes = [1, 256], strides = [1, 1]} : vector<9x256xf32> to vector<1x256xf32>
    %189 = arith.mulf %169, %188 : vector<1x256xf32>
    %190 = vector.extract_strided_slice %1 {offsets = [5, 0], sizes = [1, 256], strides = [1, 1]} : vector<9x256xf32> to vector<1x256xf32>
    %191 = arith.mulf %170, %190 : vector<1x256xf32>
    %192 = arith.addf %189, %191 : vector<1x256xf32>
    %193 = vector.extract_strided_slice %1 {offsets = [8, 0], sizes = [1, 256], strides = [1, 1]} : vector<9x256xf32> to vector<1x256xf32>
    %194 = arith.mulf %171, %193 : vector<1x256xf32>
    %195 = arith.addf %192, %194 : vector<1x256xf32>
    %196 = tpu.concatenate %179, %187, %195 in 0 : vector<1x256xf32>, vector<1x256xf32>, vector<1x256xf32> -> vector<3x256xf32>
    %c0_56 = arith.constant 0 : index
    %c0_57 = arith.constant 0 : index
    %c0_58 = arith.constant 0 : index
    %197 = vector.load %arg5[%c0_56, %c0_57, %c0_58] : memref<1x3x256xf32, #tpu.memory_space<vmem>>, vector<1x3x256xf32>
    %198 = vector.shape_cast %197 : vector<1x3x256xf32> to vector<3x256xf32>
    %199 = vector.shape_cast %196 : vector<3x256xf32> to vector<1x3x256xf32>
    tpu.vector_store %arg5[%c0_56, %c0_57, %c0_58], %199 {strides = array<i32>} : memref<1x3x256xf32, #tpu.memory_space<vmem>>, vector<1x3x256xf32>,
    %200 = tpu.concatenate %169, %170, %171 in 0 : vector<1x256xf32>, vector<1x256xf32>, vector<1x256xf32> -> vector<3x256xf32>
    %c0_59 = arith.constant 0 : index
    %c0_60 = arith.constant 0 : index
    %c0_61 = arith.constant 0 : index
    %201 = vector.load %arg6[%c0_59, %c0_60, %c0_61] : memref<1x3x256xf32, #tpu.memory_space<vmem>>, vector<1x3x256xf32>
    %202 = vector.shape_cast %201 : vector<1x3x256xf32> to vector<3x256xf32>
    %203 = vector.shape_cast %200 : vector<3x256xf32> to vector<1x3x256xf32>
    tpu.vector_store %arg6[%c0_59, %c0_60, %c0_61], %203 {strides = array<i32>} : memref<1x3x256xf32, #tpu.memory_space<vmem>>, vector<1x3x256xf32>,
    return
  }
  func.func @transform_0(%arg0: i32, %arg1: i32) -> (i32, i32) {
    %c0_i32 = arith.constant 0 : i32
    %c0_i32_0 = arith.constant 0 : i32
    %c0_i32_1 = arith.constant 0 : i32
    return %c0_i32, %c0_i32_0 : i32, i32
  }
  func.func @transform_1(%arg0: i32, %arg1: i32) -> (i32, i32) {
    %c0_i32 = arith.constant 0 : i32
    %c0_i32_0 = arith.constant 0 : i32
    %c0_i32_1 = arith.constant 0 : i32
    return %c0_i32, %c0_i32_0 : i32, i32
  }
  func.func @transform_2(%arg0: i32, %arg1: i32) -> (i32, i32, i32) {
    %c0_i32 = arith.constant 0 : i32
    %c0_i32_0 = arith.constant 0 : i32
    return %arg0, %c0_i32, %arg1 : i32, i32, i32
  }
  func.func @transform_3(%arg0: i32, %arg1: i32) -> (i32, i32, i32) {
    %c0_i32 = arith.constant 0 : i32
    %c0_i32_0 = arith.constant 0 : i32
    return %arg0, %c0_i32, %arg1 : i32, i32, i32
  }
  func.func @transform_4(%arg0: i32, %arg1: i32) -> (i32, i32, i32) {
    %c0_i32 = arith.constant 0 : i32
    %c0_i32_0 = arith.constant 0 : i32
    return %arg0, %c0_i32, %arg1 : i32, i32, i32
  }
}

</mosaic_0001>

<llo_original>
// kernel: tpu_custom_call.1
$region0: #{tpu_custom_call.1}
  #allocation0 [shape = 'u32[]', space=smem, size = 0x4, offset = 0x4, fixed_abs, tag = 'smem constant byte address 0x4 - core index']
  #allocation1 [shape = 'u32[144,128]{1,0:T(1,128)}', space=vmem, size = 0x12000, scoped, tag = 'internal scratch']
  %s0 = inlined_call_operand.vmem [shape: f32[9,3], index: 0, kind: input, shape index: {}]
  %s1 = inlined_call_operand.vmem [shape: f32[2,3], index: 1, kind: input, shape index: {}]
  %s2 = inlined_call_operand.vmem [shape: f32[2,9,256], index: 2, kind: input, shape index: {}]
  %s3 = inlined_call_operand.vmem [shape: f32[2,3,256], index: 3, kind: output, shape index: {0}]
  %s4 = inlined_call_operand.vmem [shape: f32[2,3,256], index: 4, kind: output, shape index: {1}]
  %5 = xla_tuple %s3, %s4
  %s6 = sld [smem:[#allocation0]]
  $region61: #{tpu_custom_call.1} parent=0
    _
  %s8 = ssub.s32 1, %s6
  %s9 = scalar_select 0, %s8, %s6
  $region1: #{tpu_custom_call.1} parent=0
    #allocation2 [shape = 'u8[8192]{0}', space=smem, size = 0x2000, scoped, tag = 'input window, operand 0, single buffered']
    #allocation3 [shape = 's32[2]{0}', space=sflag, size = 0x8, scoped, tag = 'scoped memory for tpu_custom_call.1']
    #allocation4 [shape = 'u8[1024]{0}', space=smem, size = 0x400, scoped, tag = 'input window, operand 1, single buffered']
    #allocation5 [shape = 's32[1]{0}', space=sflag, size = 0x4, scoped, tag = 'scoped memory for tpu_custom_call.1']
    %10 = vsyncpa [#allocation3], 0
    %11 = vsyncpa [#allocation5], 0
    loop: start=0, step=1, limit=4
    $region2: #{tpu_custom_call.1} parent=1 // loop_pre_header
      _
    $region3: #{tpu_custom_call.1} parent=1 // loop_header
      %s13 = sphi 0, %s17
      %p14 = scmp.ge.s32.totalorder %s13, 4
      %s20 = sphi 0, %s32
      %s21 = sphi 0, %s28
      %s22 = sphi 0, %s20
      %s23 = sphi 0, %s21
      %s24 = sphi 0, %s22
      %s25 = sphi 0, %s23
      %s33 = sphi 0, %s33
      %s35 = sphi 0, %s33
      %s36 = sphi 0, %s35
      %s50 = sphi 0, %s36
      %s54 = sphi 0, %s54
      %s56 = sphi 0, %s54
      %s57 = sphi 0, %s56
      %s71 = sphi 0, %s57
      %s79 = sphi 0, %s81
      %s82 = sphi 0, %s79
      %s83 = sphi 0, %s82
      %s99 = sphi 0, %s83
      %s107 = sphi 0, %s109
      %s110 = sphi 0, %s107
      %s111 = sphi 0, %s110
      %s127 = sphi 0, %s111
      %s135 = sphi 0, %s137
      %s138 = sphi 0, %s135
      %s139 = sphi 0, %s138
      %s155 = sphi 0, %s139
    $region4: #{tpu_custom_call.1} parent=1 // loop_header_branch
      %16 = sbr.rel (%p14) target = $region8
    $region5: #{tpu_custom_call.1} parent=1 // loop_body
      %s18 = ssub.s32 %s13, 1
      %s19 = ssub.s32 %s13, 2
      %s26 = sadd.s32 1, %s21
      %p27 = scmp.ge.s32.totalorder %s26, 1
      %s28 = scalar_select %p27, 0, %s26
      %s29 = sadd.s32 1, %s20
      %s30 = scalar_select %p27, %s29, %s20
      %p31 = scmp.ge.s32.totalorder %s30, 2
      %s32 = scalar_select %p31, 0, %s30
      %s34 = sadd.s32 %s33, 1
      %p37 = scmp.eq.s32.totalorder %s13, 1
      %p38 = scmp.ne.s32.totalorder %s33, %s35
      %p39 = scmp.eq.s32.totalorder %s13, 0
      %p40 = por %p38, %p39
      %p41 = scmp.ne.s32.totalorder %s33, %s35
      %p42 = scmp.eq.s32.totalorder %s18, 1
      %p43 = por %p41, %p42
      %p44 = scmp.ne.s32.totalorder %s35, %s36
      %p45 = scmp.eq.s32.totalorder %s18, 0
      %p46 = por %p44, %p45
      %p47 = scmp.ne.s32.totalorder %s35, %s36
      %p48 = scmp.eq.s32.totalorder %s19, 1
      %p49 = por %p47, %p48
      %p51 = scmp.ne.s32.totalorder %s36, %s50
      %p52 = scmp.eq.s32.totalorder %s19, 0
      %p53 = por %p51, %p52
      %s55 = sadd.s32 %s54, 1
      %p58 = scmp.eq.s32.totalorder %s13, 1
      %p59 = scmp.ne.s32.totalorder %s54, %s56
      %p60 = scmp.eq.s32.totalorder %s13, 0
      %p61 = por %p59, %p60
      %p62 = scmp.ne.s32.totalorder %s54, %s56
      %p63 = scmp.eq.s32.totalorder %s18, 1
      %p64 = por %p62, %p63
      %p65 = scmp.ne.s32.totalorder %s56, %s57
      %p66 = scmp.eq.s32.totalorder %s18, 0
      %p67 = por %p65, %p66
      %p68 = scmp.ne.s32.totalorder %s56, %s57
      %p69 = scmp.eq.s32.totalorder %s19, 1
      %p70 = por %p68, %p69
      %p72 = scmp.ne.s32.totalorder %s57, %s71
      %p73 = scmp.eq.s32.totalorder %s19, 0
      %p74 = por %p72, %p73
      %s75 = ssub.s32 %s20, %s32
      %s76 = ssub.s32 %s21, %s28
      %s77 = sor.u32 %s75, %s76
      %p78 = scmp.eq.s32.totalorder %s77, 0
      %s80 = sadd.s32 %s79, 1
      %s81 = scalar_select %p78, %s79, %s80
      %p84 = pneg %p78
      %p85 = scmp.eq.s32.totalorder %s13, 1
      %p86 = por %p84, %p85
      %p87 = scmp.ne.s32.totalorder %s79, %s82
      %p88 = scmp.eq.s32.totalorder %s13, 0
      %p89 = por %p87, %p88
      %p90 = scmp.ne.s32.totalorder %s79, %s82
      %p91 = scmp.eq.s32.totalorder %s18, 1
      %p92 = por %p90, %p91
      %p93 = scmp.ne.s32.totalorder %s82, %s83
      %p94 = scmp.eq.s32.totalorder %s18, 0
      %p95 = por %p93, %p94
      %p96 = scmp.ne.s32.totalorder %s82, %s83
      %p97 = scmp.eq.s32.totalorder %s19, 1
      %p98 = por %p96, %p97
      %p100 = scmp.ne.s32.totalorder %s83, %s99
      %p101 = scmp.eq.s32.totalorder %s19, 0
      %p102 = por %p100, %p101
      %s103 = ssub.s32 %s20, %s32
      %s104 = ssub.s32 %s21, %s28
      %s105 = sor.u32 %s103, %s104
      %p106 = scmp.eq.s32.totalorder %s105, 0
      %s108 = sadd.s32 %s107, 1
      %s109 = scalar_select %p106, %s107, %s108
      %p112 = pneg %p106
      %p113 = scmp.eq.s32.totalorder %s13, 1
      %p114 = por %p112, %p113
      %p115 = scmp.ne.s32.totalorder %s107, %s110
      %p116 = scmp.eq.s32.totalorder %s13, 0
      %p117 = por %p115, %p116
      %p118 = scmp.ne.s32.totalorder %s107, %s110
      %p119 = scmp.eq.s32.totalorder %s18, 1
      %p120 = por %p118, %p119
      %p121 = scmp.ne.s32.totalorder %s110, %s111
      %p122 = scmp.eq.s32.totalorder %s18, 0
      %p123 = por %p121, %p122
      %p124 = scmp.ne.s32.totalorder %s110, %s111
      %p125 = scmp.eq.s32.totalorder %s19, 1
      %p126 = por %p124, %p125
      %p128 = scmp.ne.s32.totalorder %s111, %s127
      %p129 = scmp.eq.s32.totalorder %s19, 0
      %p130 = por %p128, %p129
      %s131 = ssub.s32 %s20, %s32
      %s132 = ssub.s32 %s21, %s28
      %s133 = sor.u32 %s131, %s132
      %p134 = scmp.eq.s32.totalorder %s133, 0
      %s136 = sadd.s32 %s135, 1
      %s137 = scalar_select %p134, %s135, %s136
      %p140 = pneg %p134
      %p141 = scmp.eq.s32.totalorder %s13, 1
      %p142 = por %p140, %p141
      %p143 = scmp.ne.s32.totalorder %s135, %s138
      %p144 = scmp.eq.s32.totalorder %s13, 0
      %p145 = por %p143, %p144
      %p146 = scmp.ne.s32.totalorder %s135, %s138
      %p147 = scmp.eq.s32.totalorder %s18, 1
      %p148 = por %p146, %p147
      %p149 = scmp.ne.s32.totalorder %s138, %s139
      %p150 = scmp.eq.s32.totalorder %s18, 0
      %p151 = por %p149, %p150
      %p152 = scmp.ne.s32.totalorder %s138, %s139
      %p153 = scmp.eq.s32.totalorder %s19, 1
      %p154 = por %p152, %p153
      %p156 = scmp.ne.s32.totalorder %s139, %s155
      %p157 = scmp.eq.s32.totalorder %s19, 0
      %p158 = por %p156, %p157
      %p159 = scmp.le.s32.totalorder 1, %s13
      %p160 = scmp.lt.s32.totalorder %s13, 3
      %p161 = pnand %p159, %p160
      %p162 = pneg %p161
      // Predicated region
      $region9: #{tpu_custom_call.1} parent=5 // pred_check
        _
      $region10: #{tpu_custom_call.1} parent=5 // pred_check_branch
        %164 = sbr.rel (%p161) target = $region12
      $region11: #{tpu_custom_call.1} parent=5 // pred_region
        %s165 = ssub.s32 %s13, 1
        // Predicated region
        $region13: #{tpu_custom_call.1} parent=11 // pred_check
          %p166 = pneg %p46
        $region14: #{tpu_custom_call.1} parent=11 // pred_check_branch
          %168 = sbr.rel (%p166) target = $region16
        $region15: #{tpu_custom_call.1} parent=11 // pred_region
          %s170 = ssub.s32 256, 256
          %171 = vsyncadd [#allocation3], %s170
          %s172 = sshll.u32 %s0, 4
          %s173 = int_to_ptr.vmem [resolvable:$true] %s172
          %178 = dma.vmem_to_smem %s173, 256, [#allocation2], [#allocation3], 128, 128, 8
        $region16: #{tpu_custom_call.1} parent=11 // pred_fallthru
          _
        // Predicated region
        $region17: #{tpu_custom_call.1} parent=11 // pred_check
          %p179 = pneg %p67
        $region18: #{tpu_custom_call.1} parent=11 // pred_check_branch
          %181 = sbr.rel (%p179) target = $region20
        $region19: #{tpu_custom_call.1} parent=11 // pred_region
          %s183 = ssub.s32 32, 32
          %184 = vsyncadd [#allocation5], %s183
          %s186 = sshll.u32 %s1, 4
          %s187 = int_to_ptr.vmem [resolvable:$true] %s186
          %189 = dma.vmem_to_smem %s187, 32, [#allocation4], [#allocation5]
        $region20: #{tpu_custom_call.1} parent=11 // pred_fallthru
          _
      $region12: #{tpu_custom_call.1} parent=5 // pred_fallthru
        _
      %p190 = scmp.lt.s32.totalorder %s13, 2
      // Predicated region
      $region21: #{tpu_custom_call.1} parent=5 // pred_check
        %p191 = pneg %p190
      $region22: #{tpu_custom_call.1} parent=5 // pred_check_branch
        %193 = sbr.rel (%p191) target = $region24
      $region23: #{tpu_custom_call.1} parent=5 // pred_region
        // Predicated region
        $region25: #{tpu_custom_call.1} parent=23 // pred_check
          %p194 = pneg %p89
        $region26: #{tpu_custom_call.1} parent=23 // pred_check_branch
          %196 = sbr.rel (%p194) target = $region28
        $region27: #{tpu_custom_call.1} parent=23 // pred_region
          %s197 = smul.u32 2, %s21
          %p198 = scmp.lt.s32.totalorder %s20, 1
          %s199 = scalar_select %p198, %s20, 1
          %p200 = scmp.lt.s32.totalorder %s197, 1
          %s201 = scalar_select %p200, %s197, 1
          %s202 = smul.addr %s199, 4
          %s203 = sadd.s32 %s201, %s202
          %s204 = smul.addr %s203, 8
          %s205 = scalar_lea.vmem %s2, %s204
          %s206 = smul.u32 2, %s21
        $region28: #{tpu_custom_call.1} parent=23 // pred_fallthru
          _
      $region24: #{tpu_custom_call.1} parent=5 // pred_fallthru
        _
      %p207 = scmp.le.s32.totalorder 1, %s13
      %p208 = scmp.lt.s32.totalorder %s13, 3
      %p209 = pnand %p207, %p208
      %p210 = pneg %p209
      // Predicated region
      $region29: #{tpu_custom_call.1} parent=5 // pred_check
        _
      $region30: #{tpu_custom_call.1} parent=5 // pred_check_branch
        %212 = sbr.rel (%p209) target = $region32
      $region31: #{tpu_custom_call.1} parent=5 // pred_region
        %s213 = ssub.s32 %s13, 1
        // Predicated region
        $region33: #{tpu_custom_call.1} parent=31 // pred_check
          %p214 = pneg %p46
        $region34: #{tpu_custom_call.1} parent=31 // pred_check_branch
          %216 = sbr.rel (%p214) target = $region36
        $region35: #{tpu_custom_call.1} parent=31 // pred_region
          %217 = dma.done [#allocation3], 256
        $region36: #{tpu_custom_call.1} parent=31 // pred_fallthru
          _
        // Predicated region
        $region37: #{tpu_custom_call.1} parent=31 // pred_check
          %p218 = pneg %p67
        $region38: #{tpu_custom_call.1} parent=31 // pred_check_branch
          %220 = sbr.rel (%p218) target = $region40
        $region39: #{tpu_custom_call.1} parent=31 // pred_region
          %221 = dma.done [#allocation5], 32
        $region40: #{tpu_custom_call.1} parent=31 // pred_fallthru
          _
        %222 = sfence
        %p223 = pneg %p46
        %p224 = pneg %p43
        %p225 = pneg %p67
        %p226 = pneg %p64
        %s227 = smul.u32 2, %s23
        %p228 = scmp.lt.s32.totalorder %s22, 1
        %s229 = scalar_select %p228, %s22, 1
        %p230 = scmp.lt.s32.totalorder %s227, 1
        %s231 = scalar_select %p230, %s227, 1
        %s232 = smul.addr %s229, 4
        %s233 = sadd.s32 %s231, %s232
        %s234 = smul.addr %s233, 8
        %s235 = scalar_lea.vmem %s2, %s234
        %p236 = pneg %p95
        %p237 = pneg %p92
        %p238 = pneg %p123
        %p239 = pneg %p120
        %s240 = smul.u32 2, %s23
        %p241 = scmp.lt.s32.totalorder %s22, 1
        %s242 = scalar_select %p241, %s22, 1
        %p243 = scmp.lt.s32.totalorder %s240, 1
        %s244 = scalar_select %p243, %s240, 1
        %s245 = smul.addr %s242, 2
        %s246 = sadd.s32 %s244, %s245
        %s247 = smul.addr %s246, 4
        %s248 = scalar_lea.vmem %s3, %s247
        %p249 = pneg %p151
        %p250 = pneg %p148
        %s251 = smul.u32 2, %s23
        %p252 = scmp.lt.s32.totalorder %s22, 1
        %s253 = scalar_select %p252, %s22, 1
        %p254 = scmp.lt.s32.totalorder %s251, 1
        %s255 = scalar_select %p254, %s251, 1
        %s256 = smul.addr %s253, 2
        %s257 = sadd.s32 %s255, %s256
        %s258 = smul.addr %s257, 4
        %s259 = scalar_lea.vmem %s4, %s258
        %s260 = smul.u32 2, %s23
        %p261 = scmp.lt.s32.totalorder %s22, 1
        %s262 = scalar_select %p261, %s22, 1
        %p263 = scmp.lt.s32.totalorder %s260, 1
        %s264 = scalar_select %p263, %s260, 1
        %s265 = smul.addr %s262, 4
        %s266 = sadd.s32 %s264, %s265
        %s267 = smul.addr %s266, 8
        %s268 = scalar_lea.vmem %s2, %s267
        %s269 = smul.u32 2, %s23
        %s270 = smul.u32 2, %s23
        %p271 = scmp.lt.s32.totalorder %s22, 1
        %s272 = scalar_select %p271, %s22, 1
        %p273 = scmp.lt.s32.totalorder %s270, 1
        %s274 = scalar_select %p273, %s270, 1
        %s275 = smul.addr %s272, 2
        %s276 = sadd.s32 %s274, %s275
        %s277 = smul.addr %s276, 4
        %s278 = scalar_lea.vmem %s3, %s277
        %s279 = smul.u32 2, %s23
        %s280 = smul.u32 2, %s23
        %p281 = scmp.lt.s32.totalorder %s22, 1
        %s282 = scalar_select %p281, %s22, 1
        %p283 = scmp.lt.s32.totalorder %s280, 1
        %s284 = scalar_select %p283, %s280, 1
        %s285 = smul.addr %s282, 2
        %s286 = sadd.s32 %s284, %s285
        %s287 = smul.addr %s286, 4
        %s288 = scalar_lea.vmem %s4, %s287
        %s289 = smul.u32 2, %s23
        %v290 = vld [vmem:[%s268] sm:$0xff]
        %v291 = vld [vmem:[%s268 + $0x8] sm:$0xff]
        %v292 = vld [vmem:[%s268 + $0x10] sm:$0x1]
        %v293 = vld [vmem:[%s268 + $0x18] sm:$0x1]
        %s294 = sld [smem:[#allocation2]]
        %v295 = vstv %s294
        %v296 = vmul.f32 %v290, %v295
        %v297 = vmul.f32 %v291, %v295
        %s298 = sld [smem:[#allocation2 + $0x80]]
        %v299 = vstv %s298
        %v300 = vmul.f32 %v290, %v299
        %v301 = vmul.f32 %v291, %v299
        %v304 = vrot.slane %v300, 1
        %v305 = vrot.slane %v301, 1
        %v308 = vadd.f32 %v296, %v304
        %v309 = vadd.f32 %v297, %v305
        %s310 = sld [smem:[#allocation2 + $0x100]]
        %v311 = vstv %s310
        %v312 = vmul.f32 %v290, %v311
        %v313 = vmul.f32 %v291, %v311
        %v316 = vrot.slane %v312, 2
        %v317 = vrot.slane %v313, 2
        %v320 = vadd.f32 %v308, %v316
        %v321 = vadd.f32 %v309, %v317
        %s322 = sld [smem:[#allocation2 + $0x180]]
        %v323 = vstv %s322
        %v324 = vmul.f32 %v290, %v323
        %v325 = vmul.f32 %v291, %v323
        %v328 = vrot.slane %v324, 3
        %v329 = vrot.slane %v325, 3
        %v332 = vadd.f32 %v320, %v328
        %v333 = vadd.f32 %v321, %v329
        %s334 = sld [smem:[#allocation2 + $0x200]]
        %v335 = vstv %s334
        %v336 = vmul.f32 %v290, %v335
        %v337 = vmul.f32 %v291, %v335
        %v340 = vrot.slane %v336, 4
        %v341 = vrot.slane %v337, 4
        %v344 = vadd.f32 %v332, %v340
        %v345 = vadd.f32 %v333, %v341
        %s346 = sld [smem:[#allocation2 + $0x280]]
        %v347 = vstv %s346
        %v348 = vmul.f32 %v290, %v347
        %v349 = vmul.f32 %v291, %v347
        %v352 = vrot.slane %v348, 5
        %v353 = vrot.slane %v349, 5
        %v356 = vadd.f32 %v344, %v352
        %v357 = vadd.f32 %v345, %v353
        %s358 = sld [smem:[#allocation2 + $0x300]]
        %v359 = vstv %s358
        %v360 = vmul.f32 %v290, %v359
        %v361 = vmul.f32 %v291, %v359
        %v364 = vrot.slane %v360, 6
        %v365 = vrot.slane %v361, 6
        %v368 = vadd.f32 %v356, %v364
        %v369 = vadd.f32 %v357, %v365
        %s370 = sld [smem:[#allocation2 + $0x380]]
        %v371 = vstv %s370
        %v372 = vmul.f32 %v290, %v371
        %v373 = vmul.f32 %v291, %v371
        %v376 = vrot.slane %v372, 7
        %v377 = vrot.slane %v373, 7
        %v380 = vadd.f32 %v368, %v376
        %v381 = vadd.f32 %v369, %v377
        %s382 = sld [smem:[#allocation2 + $0x400]]
        %v383 = vstv %s382
        %v384 = vmul.f32 %v292, %v383
        %v385 = vmul.f32 %v293, %v383
        %v386 = vadd.f32 %v380, %v384
        %v387 = vadd.f32 %v381, %v385
        %s388 = smul.u32 %s22, 128
        %s389 = sld [smem:[#allocation4 + %s388]]
        %v390 = vstv %s389
        %v391 = vadd.f32 %v386, %v390
        %v392 = vadd.f32 %v387, %v390
        %v393 = vmax.f32 %v391, -1000.0
        %v394 = vmax.f32 %v392, -1000.0
        %v395 = vmin.f32 %v393, 1000.0
        %v396 = vmin.f32 %v394, 1000.0
        %s397 = sld [smem:[#allocation2 + $0x1]]
        %v398 = vstv %s397
        %v399 = vmul.f32 %v290, %v398
        %v400 = vmul.f32 %v291, %v398
        %s401 = sld [smem:[#allocation2 + $0x81]]
        %v402 = vstv %s401
        %v403 = vmul.f32 %v290, %v402
        %v404 = vmul.f32 %v291, %v402
        %v407 = vrot.slane %v403, 1
        %v408 = vrot.slane %v404, 1
        %v411 = vadd.f32 %v399, %v407
        %v412 = vadd.f32 %v400, %v408
        %s413 = sld [smem:[#allocation2 + $0x101]]
        %v414 = vstv %s413
        %v415 = vmul.f32 %v290, %v414
        %v416 = vmul.f32 %v291, %v414
        %v419 = vrot.slane %v415, 2
        %v420 = vrot.slane %v416, 2
        %v423 = vadd.f32 %v411, %v419
        %v424 = vadd.f32 %v412, %v420
        %s425 = sld [smem:[#allocation2 + $0x181]]
        %v426 = vstv %s425
        %v427 = vmul.f32 %v290, %v426
        %v428 = vmul.f32 %v291, %v426
        %v431 = vrot.slane %v427, 3
        %v432 = vrot.slane %v428, 3
        %v435 = vadd.f32 %v423, %v431
        %v436 = vadd.f32 %v424, %v432
        %s437 = sld [smem:[#allocation2 + $0x201]]
        %v438 = vstv %s437
        %v439 = vmul.f32 %v290, %v438
        %v440 = vmul.f32 %v291, %v438
        %v443 = vrot.slane %v439, 4
        %v444 = vrot.slane %v440, 4
        %v447 = vadd.f32 %v435, %v443
        %v448 = vadd.f32 %v436, %v444
        %s449 = sld [smem:[#allocation2 + $0x281]]
        %v450 = vstv %s449
        %v451 = vmul.f32 %v290, %v450
        %v452 = vmul.f32 %v291, %v450
        %v455 = vrot.slane %v451, 5
        %v456 = vrot.slane %v452, 5
        %v459 = vadd.f32 %v447, %v455
        %v460 = vadd.f32 %v448, %v456
        %s461 = sld [smem:[#allocation2 + $0x301]]
        %v462 = vstv %s461
        %v463 = vmul.f32 %v290, %v462
        %v464 = vmul.f32 %v291, %v462
        %v467 = vrot.slane %v463, 6
        %v468 = vrot.slane %v464, 6
        %v471 = vadd.f32 %v459, %v467
        %v472 = vadd.f32 %v460, %v468
        %s473 = sld [smem:[#allocation2 + $0x381]]
        %v474 = vstv %s473
        %v475 = vmul.f32 %v290, %v474
        %v476 = vmul.f32 %v291, %v474
        %v479 = vrot.slane %v475, 7
        %v480 = vrot.slane %v476, 7
        %v483 = vadd.f32 %v471, %v479
        %v484 = vadd.f32 %v472, %v480
        %s485 = sld [smem:[#allocation2 + $0x401]]
        %v486 = vstv %s485
        %v487 = vmul.f32 %v292, %v486
        %v488 = vmul.f32 %v293, %v486
        %v489 = vadd.f32 %v483, %v487
        %v490 = vadd.f32 %v484, %v488
        %s491 = sadd.s32 %s388, 1
        %s492 = sld [smem:[#allocation4 + %s491]]
        %v493 = vstv %s492
        %v494 = vadd.f32 %v489, %v493
        %v495 = vadd.f32 %v490, %v493
        %v496 = vmax.f32 %v494, -1000.0
        %v497 = vmax.f32 %v495, -1000.0
        %v498 = vmin.f32 %v496, 1000.0
        %v499 = vmin.f32 %v497, 1000.0
        %s500 = sld [smem:[#allocation2 + $0x2]]
        %v501 = vstv %s500
        %v502 = vmul.f32 %v290, %v501
        %v503 = vmul.f32 %v291, %v501
        %s504 = sld [smem:[#allocation2 + $0x82]]
        %v505 = vstv %s504
        %v506 = vmul.f32 %v290, %v505
        %v507 = vmul.f32 %v291, %v505
        %v510 = vrot.slane %v506, 1
        %v511 = vrot.slane %v507, 1
        %v514 = vadd.f32 %v502, %v510
        %v515 = vadd.f32 %v503, %v511
        %s516 = sld [smem:[#allocation2 + $0x102]]
        %v517 = vstv %s516
        %v518 = vmul.f32 %v290, %v517
        %v519 = vmul.f32 %v291, %v517
        %v522 = vrot.slane %v518, 2
        %v523 = vrot.slane %v519, 2
        %v526 = vadd.f32 %v514, %v522
        %v527 = vadd.f32 %v515, %v523
        %s528 = sld [smem:[#allocation2 + $0x182]]
        %v529 = vstv %s528
        %v530 = vmul.f32 %v290, %v529
        %v531 = vmul.f32 %v291, %v529
        %v534 = vrot.slane %v530, 3
        %v535 = vrot.slane %v531, 3
        %v538 = vadd.f32 %v526, %v534
        %v539 = vadd.f32 %v527, %v535
        %s540 = sld [smem:[#allocation2 + $0x202]]
        %v541 = vstv %s540
        %v542 = vmul.f32 %v290, %v541
        %v543 = vmul.f32 %v291, %v541
        %v546 = vrot.slane %v542, 4
        %v547 = vrot.slane %v543, 4
        %v550 = vadd.f32 %v538, %v546
        %v551 = vadd.f32 %v539, %v547
        %s552 = sld [smem:[#allocation2 + $0x282]]
        %v553 = vstv %s552
        %v554 = vmul.f32 %v290, %v553
        %v555 = vmul.f32 %v291, %v553
        %v558 = vrot.slane %v554, 5
        %v559 = vrot.slane %v555, 5
        %v562 = vadd.f32 %v550, %v558
        %v563 = vadd.f32 %v551, %v559
        %s564 = sld [smem:[#allocation2 + $0x302]]
        %v565 = vstv %s564
        %v566 = vmul.f32 %v290, %v565
        %v567 = vmul.f32 %v291, %v565
        %v570 = vrot.slane %v566, 6
        %v571 = vrot.slane %v567, 6
        %v574 = vadd.f32 %v562, %v570
        %v575 = vadd.f32 %v563, %v571
        %s576 = sld [smem:[#allocation2 + $0x382]]
        %v577 = vstv %s576
        %v578 = vmul.f32 %v290, %v577
        %v579 = vmul.f32 %v291, %v577
        %v582 = vrot.slane %v578, 7
        %v583 = vrot.slane %v579, 7
        %v586 = vadd.f32 %v574, %v582
        %v587 = vadd.f32 %v575, %v583
        %s588 = sld [smem:[#allocation2 + $0x402]]
        %v589 = vstv %s588
        %v590 = vmul.f32 %v292, %v589
        %v591 = vmul.f32 %v293, %v589
        %v592 = vadd.f32 %v586, %v590
        %v593 = vadd.f32 %v587, %v591
        %s594 = sadd.s32 %s388, 2
        %s595 = sld [smem:[#allocation4 + %s594]]
        %v596 = vstv %s595
        %v597 = vadd.f32 %v592, %v596
        %v598 = vadd.f32 %v593, %v596
        %v599 = vmax.f32 %v597, -1000.0
        %v600 = vmax.f32 %v598, -1000.0
        %v601 = vmin.f32 %v599, 1000.0
        %v602 = vmin.f32 %v600, 1000.0
        %v603 = vmax.f32 %v395, %v498
        %v604 = vmax.f32 %v396, %v499
        %v605 = vmax.f32 %v603, %v601
        %v606 = vmax.f32 %v604, %v602
        %v607 = vsub.f32 %v395, %v605
        %v608 = vsub.f32 %v396, %v606
        %v609 = vmul.f32 %v607, 1.442695
        %v610 = vpow.pop %v609
        %v611 = vmul.f32 %v608, 1.442695
        %v612 = vpow.pop %v611
        %v613 = vsub.f32 %v498, %v605
        %v614 = vsub.f32 %v499, %v606
        %v615 = vmul.f32 %v613, 1.442695
        %v616 = vpow.pop %v615
        %v617 = vmul.f32 %v614, 1.442695
        %v618 = vpow.pop %v617
        %v619 = vsub.f32 %v601, %v605
        %v620 = vsub.f32 %v602, %v606
        %v621 = vmul.f32 %v619, 1.442695
        %v622 = vpow.pop %v621
        %v623 = vmul.f32 %v620, 1.442695
        %v624 = vpow.pop %v623
        %v625 = vadd.f32 %v610, %v616
        %v626 = vadd.f32 %v612, %v618
        %v627 = vadd.f32 %v625, %v622
        %v628 = vadd.f32 %v626, %v624
        %v629 = vrcp.pop %v627
        %v630 = vrcp.pop %v628
        %v631 = vmul.f32 %v610, %v629
        %v632 = vmul.f32 %v612, %v630
        %v633 = vmul.f32 %v616, %v629
        %v634 = vmul.f32 %v618, %v630
        %v635 = vmul.f32 %v622, %v629
        %v636 = vmul.f32 %v624, %v630
        %v637 = vmul.f32 %v631, %v290
        %v638 = vmul.f32 %v632, %v291
        %v641 = vrot.slane %v290, 3
        %v642 = vrot.slane %v291, 3
        %v645 = vmul.f32 %v633, %v641
        %v646 = vmul.f32 %v634, %v642
        %v647 = vadd.f32 %v637, %v645
        %v648 = vadd.f32 %v638, %v646
        %v649 = vrot.slane %v290, 6
        %v650 = vrot.slane %v291, 6
        %v653 = vmul.f32 %v635, %v649
        %v654 = vmul.f32 %v636, %v650
        %v655 = vadd.f32 %v647, %v653
        %v656 = vadd.f32 %v648, %v654
        %v657 = vrot.slane %v290, 1
        %v658 = vrot.slane %v291, 1
        %v661 = vmul.f32 %v631, %v657
        %v662 = vmul.f32 %v632, %v658
        %v663 = vrot.slane %v290, 4
        %v664 = vrot.slane %v291, 4
        %v667 = vmul.f32 %v633, %v663
        %v668 = vmul.f32 %v634, %v664
        %v669 = vadd.f32 %v661, %v667
        %v670 = vadd.f32 %v662, %v668
        %v671 = vrot.slane %v290, 7
        %v672 = vrot.slane %v291, 7
        %v675 = vmul.f32 %v635, %v671
        %v676 = vmul.f32 %v636, %v672
        %v677 = vadd.f32 %v669, %v675
        %v678 = vadd.f32 %v670, %v676
        %v679 = vrot.slane %v290, 2
        %v680 = vrot.slane %v291, 2
        %v683 = vmul.f32 %v631, %v679
        %v684 = vmul.f32 %v632, %v680
        %v685 = vrot.slane %v290, 5
        %v686 = vrot.slane %v291, 5
        %v689 = vmul.f32 %v633, %v685
        %v690 = vmul.f32 %v634, %v686
        %v691 = vadd.f32 %v683, %v689
        %v692 = vadd.f32 %v684, %v690
        %v693 = vmul.f32 %v635, %v292
        %v694 = vmul.f32 %v636, %v293
        %v695 = vadd.f32 %v691, %v693
        %v696 = vadd.f32 %v692, %v694
        %v699 = vrot.slane %v677, 7
        %v700 = vrot.slane %v678, 7
        %v705 = vrot.slane %v695, 6
        %v706 = vrot.slane %v696, 6
        %vm709 = vcmask 1040384
        %v710 = vsel %vm709, %v655, %v699
        %v711 = vsel %vm709, %v656, %v700
        %vm712 = vcmask 1041408
        %v713 = vsel %vm712, %v710, %v705
        %v714 = vsel %vm712, %v711, %v706
        %v717 = vcombine.low %v713, %v714
        %719 = vst [vmem:[%s278] sm:$0x77] %v717
        %v722 = vrot.slane %v633, 7
        %v723 = vrot.slane %v634, 7
        %v728 = vrot.slane %v635, 6
        %v729 = vrot.slane %v636, 6
        %v732 = vsel %vm709, %v631, %v722
        %v733 = vsel %vm709, %v632, %v723
        %v734 = vsel %vm712, %v732, %v728
        %v735 = vsel %vm712, %v733, %v729
        %v738 = vcombine.low %v734, %v735
        %740 = vst [vmem:[%s288] sm:$0x77] %v738
        %s741 = smul.u32 2, %s23
        %p742 = scmp.lt.s32.totalorder %s22, 1
        %s743 = scalar_select %p742, %s22, 1
        %p744 = scmp.lt.s32.totalorder %s741, 1
        %s745 = scalar_select %p744, %s741, 1
        %s746 = smul.addr %s743, 2
        %s747 = sadd.s32 %s745, %s746
        %s748 = smul.addr %s747, 4
        %s749 = scalar_lea.vmem %s3, %s748
        %s750 = smul.u32 2, %s23
        %p751 = scmp.lt.s32.totalorder %s22, 1
        %s752 = scalar_select %p751, %s22, 1
        %p753 = scmp.lt.s32.totalorder %s750, 1
        %s754 = scalar_select %p753, %s750, 1
        %s755 = smul.addr %s752, 2
        %s756 = sadd.s32 %s754, %s755
        %s757 = smul.addr %s756, 4
        %s758 = scalar_lea.vmem %s4, %s757
        // Predicated region
        $region41: #{tpu_custom_call.1} parent=31 // pred_check
          %p759 = pneg %p120
        $region42: #{tpu_custom_call.1} parent=31 // pred_check_branch
          %761 = sbr.rel (%p759) target = $region44
        $region43: #{tpu_custom_call.1} parent=31 // pred_region
          %s762 = smul.u32 2, %s23
        $region44: #{tpu_custom_call.1} parent=31 // pred_fallthru
          _
        // Predicated region
        $region45: #{tpu_custom_call.1} parent=31 // pred_check
          %p763 = pneg %p148
        $region46: #{tpu_custom_call.1} parent=31 // pred_check_branch
          %765 = sbr.rel (%p763) target = $region48
        $region47: #{tpu_custom_call.1} parent=31 // pred_region
          %s766 = smul.u32 2, %s23
        $region48: #{tpu_custom_call.1} parent=31 // pred_fallthru
          _
      $region32: #{tpu_custom_call.1} parent=5 // pred_fallthru
        _
      %p767 = scmp.le.s32.totalorder 2, %s13
      // Predicated region
      $region49: #{tpu_custom_call.1} parent=5 // pred_check
        %p768 = pneg %p767
      $region50: #{tpu_custom_call.1} parent=5 // pred_check_branch
        %770 = sbr.rel (%p768) target = $region52
      $region51: #{tpu_custom_call.1} parent=5 // pred_region
        %s771 = ssub.s32 %s13, 2
        // Predicated region
        $region53: #{tpu_custom_call.1} parent=51 // pred_check
          %p772 = pneg %p126
        $region54: #{tpu_custom_call.1} parent=51 // pred_check_branch
          %774 = sbr.rel (%p772) target = $region56
        $region55: #{tpu_custom_call.1} parent=51 // pred_region
          %s775 = smul.u32 2, %s25
          %p776 = scmp.lt.s32.totalorder %s24, 1
          %s777 = scalar_select %p776, %s24, 1
          %p778 = scmp.lt.s32.totalorder %s775, 1
          %s779 = scalar_select %p778, %s775, 1
          %s780 = smul.addr %s777, 2
          %s781 = sadd.s32 %s779, %s780
          %s782 = smul.addr %s781, 4
          %s783 = scalar_lea.vmem %s3, %s782
        $region56: #{tpu_custom_call.1} parent=51 // pred_fallthru
          _
        // Predicated region
        $region57: #{tpu_custom_call.1} parent=51 // pred_check
          %p784 = pneg %p154
        $region58: #{tpu_custom_call.1} parent=51 // pred_check_branch
          %786 = sbr.rel (%p784) target = $region60
        $region59: #{tpu_custom_call.1} parent=51 // pred_region
          %s787 = smul.u32 2, %s25
          %p788 = scmp.lt.s32.totalorder %s24, 1
          %s789 = scalar_select %p788, %s24, 1
          %p790 = scmp.lt.s32.totalorder %s787, 1
          %s791 = scalar_select %p790, %s787, 1
          %s792 = smul.addr %s789, 2
          %s793 = sadd.s32 %s791, %s792
          %s794 = smul.addr %s793, 4
          %s795 = scalar_lea.vmem %s4, %s794
        $region60: #{tpu_custom_call.1} parent=51 // pred_fallthru
          _
      $region52: #{tpu_custom_call.1} parent=5 // pred_fallthru
        _
    $region6: #{tpu_custom_call.1} parent=1 // loop_footer
      %s17 = sadd.s32 1, %s13
    $region7: #{tpu_custom_call.1} parent=1 // loop_footer_branch
      %12 = sbr.rel target = $region3
    $region8: #{tpu_custom_call.1} parent=1 // loop_exit
      _
    %796 = vsyncpa [#allocation3], 1
    %s797 = scalar_lea.sflag [#allocation3], 1
    %798 = vsyncpa %s797, 1
    %799 = vsyncpa [#allocation5], 1

</llo_original>
